<compile_context>
chip_gen: v6e
topology: v6e:2x2x1
jax: 0.10.0
libtpu: 0.0.40
codegen_flags: <defaults>
</compile_context>

<pallas_src>
import functools

import jax
import jax.numpy as jnp
from jax.experimental import pallas as pl
from jax.experimental.pallas import tpu as pltpu


def mlp_kernel(x_ref, w1_ref, b1_ref, w2_ref, b2_ref, w3_ref, b3_ref, o_ref,
               *, use_bf16):
    x = x_ref[...]                                       # (bt, D) f32
    w1 = w1_ref[...]
    w2 = w2_ref[...]
    if use_bf16:                                         # v6e/v7x native MXU rate
        x = x.astype(jnp.bfloat16)
        w1 = w1.astype(jnp.bfloat16)
        w2 = w2.astype(jnp.bfloat16)
    # fc1 + relu (MXU, f32 accumulate)
    h1 = jnp.dot(x, w1, preferred_element_type=jnp.float32) + b1_ref[...]
    h1 = jnp.maximum(h1, 0.0)
    if use_bf16:
        h1 = h1.astype(jnp.bfloat16)
    # fc2 + relu (MXU, f32 accumulate)
    h2 = jnp.dot(h1, w2, preferred_element_type=jnp.float32) + b2_ref[...]
    h2 = jnp.maximum(h2, 0.0)                            # (bt, 32) f32
    # out layer (K=32, N=1): VPU multiply + cross-sublane reduce on h2^T,
    # producing a lane-dense (1, bt) row (batch on lanes).  Review alternative
    # (multiply first, lane-reduce to (bt, 1), relayout only the bt logits)
    # moves ~32x less data through the XLU -- adopt if the bundle dump shows
    # this transpose on the critical slot.
    h2_t = h2.T                                          # (32, bt) via XLU
    logits = jnp.sum(h2_t * w3_ref[...], axis=0, keepdims=True) + b3_ref[...]
    o_ref[...] = jax.nn.sigmoid(logits).astype(o_ref.dtype)   # (1, bt)


def _round_up(x, m):
    return ((x + m - 1) // m) * m


def _vmem_capacity_bytes():
    try:
        cap = getattr(pltpu.get_tpu_info(), "vmem_capacity_bytes", None)
        if cap:
            return int(cap)
    except Exception:
        pass
    return 64 << 20          # conservative fallback (v7x per-core VMEM)


def _choose_batch_tile(batch, d, h1, h2, vmem_budget):
    """Size the batch tile purely from the VMEM budget (no arbitrary cap)."""
    # Resident weights/biases (counted 2x for buffering safety).
    weight_bytes = 2 * 4 * (d * h1 + h1 + h1 * h2 + h2 + h2 + 1)
    # Per batch row: double-buffered x row, h1/h2/h2^T temps, lane-dense out.
    per_row_bytes = 4 * (2 * d + h1 + 2 * h2 + 4)
    avail = vmem_budget - weight_bytes - (4 << 20)       # compiler-scratch reserve
    if avail <= 128 * per_row_bytes:
        # TODO(synk): K-tile over input_dim (extra 'arbitrary' grid axis + f32
        # fc1 accumulator scratch) for very wide inputs on 64 MiB-VMEM parts.
        return 128
    bt = min(avail // (2 * per_row_bytes), 1 << 16)      # 2x headroom, sane ceiling
    bt = max(128, (bt // 128) * 128)
    # Prefer >= 4 grid steps (>= 2 per v7x TensorCore) when the batch allows,
    # so each core's x DMA prologue/epilogue overlaps with compute.
    if batch >= 4 * 128:
        bt = min(bt, max(128, _round_up(pl.cdiv(batch, 4), 128)))
    return bt


def dnn_model_forward(x, params, *, batch_tile=None, use_bf16=False, x_buffers=None):
    """x: (B, input_dim) float32. Returns (B, 1) float32 sigmoid output."""
    w1, b1, w2, b2, w3, b3 = params
    B, D = x.shape
    H1 = w1.shape[1]          # 64
    H2 = w2.shape[1]          # 32
    O = w3.shape[1]           # 1
    assert O == 1

    vmem_budget = (3 * _vmem_capacity_bytes()) // 4      # ~96 MiB v5e/v6e, ~48 MiB v7x

    bt = int(batch_tile) if batch_tile is not None else _choose_batch_tile(
        B, D, H1, H2, vmem_budget)
    if bt >= B:
        bt = B                                   # single block: full-dim blocks are always legal
    else:
        bt = max(128, _round_up(bt, 128))        # lane-dense out block needs a 128 multiple
        if bt >= B:
            bt = B
    grid_b = pl.cdiv(B, bt)                      # ragged B -> partial last block (no jnp.pad copy)

    # Explicit VMEM budget for this tiling, clipped to the per-chip cap.
    est = 4 * (2 * bt * D                                        # x (double buffered)
               + 2 * (D * H1 + H1 * H2 + H2 * O + H1 + H2 + O)   # weights / biases
               + 4 * bt                                          # lane-dense out (buffered)
               + bt * (H1 + 2 * H2))                             # h1, h2, h2^T temps
    vmem_limit = int(min(vmem_budget, max(16 << 20, 2 * est)))

    x_spec_kwargs = {}
    if x_buffers is not None:                    # optional deeper pipelining of the x stream
        x_spec_kwargs["pipeline_mode"] = pl.Buffered(int(x_buffers))

    kernel = functools.partial(mlp_kernel, use_bf16=use_bf16)

    out_row = pl.pallas_call(
        kernel,
        out_shape=jax.ShapeDtypeStruct((1, B), jnp.float32),
        grid_spec=pltpu.PrefetchScalarGridSpec(
            num_scalar_prefetch=0,
            grid=(grid_b,),
            in_specs=[
                pl.BlockSpec((bt, D), lambda i: (i, 0), **x_spec_kwargs),  # x (streamed)
                pl.BlockSpec((D, H1), lambda i: (0, 0)),   # W1 (resident)
                pl.BlockSpec((1, H1), lambda i: (0, 0)),   # b1
                pl.BlockSpec((H1, H2), lambda i: (0, 0)),  # W2
                pl.BlockSpec((1, H2), lambda i: (0, 0)),   # b2
                pl.BlockSpec((H2, O), lambda i: (0, 0)),   # W3 (32, 1) column
                pl.BlockSpec((1, O), lambda i: (0, 0)),    # b3
            ],
            out_specs=pl.BlockSpec((1, bt), lambda i: (0, i)),  # lane-dense row
        ),
        compiler_params=pltpu.CompilerParams(
            dimension_semantics=("parallel",),
            vmem_limit_bytes=vmem_limit,
        ),
    )(x, w1, b1, w2, b2, w3, b3)

    return out_row.reshape(B, 1)


def init_params(key, input_dim):
    """torch.nn.Linear-style init U(-1/sqrt(fan_in), 1/sqrt(fan_in)); weights
    stored as (in_features, out_features) so the kernel computes x @ W + b."""
    dims = [(input_dim, 64), (64, 32), (32, 1)]
    params = []
    for fan_in, fan_out in dims:
        key, kw, kb = jax.random.split(key, 3)
        bound = 1.0 / jnp.sqrt(jnp.float32(fan_in))
        w = jax.random.uniform(kw, (fan_in, fan_out), jnp.float32, -bound, bound)
        b = jax.random.uniform(kb, (1, fan_out), jnp.float32, -bound, bound)
        params.extend([w, b])
    return tuple(params)


def reference_forward(x, params):
    w1, b1, w2, b2, w3, b3 = params
    h1 = jnp.maximum(x @ w1 + b1, 0.0)
    h2 = jnp.maximum(h1 @ w2 + b2, 0.0)
    return jax.nn.sigmoid(h2 @ w3 + b3)


def _check(out, ref, atol, rtol, name):
    assert out.shape == ref.shape, (name, out.shape, ref.shape)
    err = float(jnp.max(jnp.abs(out - ref)))
    assert jnp.allclose(out, ref, atol=atol, rtol=rtol), f"{name}: max abs diff {err}"


if __name__ == "__main__":
    key = jax.random.PRNGKey(0)
    key, kp, kx1, kx2, kx3 = jax.random.split(key, 5)

    input_dim = 32
    params = init_params(kp, input_dim)

    # TPU default matmul precision feeds the MXU bf16 inputs (f32 accumulate)
    # on the XLA reference and possibly on the Pallas dots, while the kernel's
    # final N=1 layer is exact f32; tolerances below cover that small gap.

    # Case 1: auto tile -> 4 grid steps of 128 (>= 2 per v7x TensorCore).
    x1 = jax.random.normal(kx1, (512, input_dim), jnp.float32)
    out1 = jax.block_until_ready(dnn_model_forward(x1, params))
    _check(out1, reference_forward(x1, params), 5e-3, 5e-3, "f32 auto-tile")

    # Case 2: ragged batch with forced tile -> partial last block, no padding copy.
    x2 = jax.random.normal(kx2, (200, input_dim), jnp.float32)
    out2 = jax.block_until_ready(dnn_model_forward(x2, params, batch_tile=128))
    _check(out2, reference_forward(x2, params), 5e-3, 5e-3, "f32 ragged")

    # Case 3: bf16 matmul path (native MXU rate on v6e/v7x) -> looser tolerance.
    x3 = jax.random.normal(kx3, (384, input_dim), jnp.float32)
    out3 = jax.block_until_ready(dnn_model_forward(x3, params, use_bf16=True))
    _check(out3, reference_forward(x3, params), 2.5e-2, 2.5e-2, "bf16")

    print("KERNEL_OK")
</pallas_src>

<mosaic_0001>
module attributes {stable_mosaic.version = 11 : i64} {
  func.func @mlp_kernel(%arg0: i32, %arg1: memref<128x32xf32, #tpu.memory_space<vmem>>, %arg2: memref<32x64xf32, #tpu.memory_space<vmem>>, %arg3: memref<1x64xf32, #tpu.memory_space<vmem>>, %arg4: memref<64x32xf32, #tpu.memory_space<vmem>>, %arg5: memref<1x32xf32, #tpu.memory_space<vmem>>, %arg6: memref<32x1xf32, #tpu.memory_space<vmem>>, %arg7: memref<1x1xf32, #tpu.memory_space<vmem>>, %arg8: memref<1x128xf32, #tpu.memory_space<vmem>>) attributes {dimension_semantics = [#tpu.dimension_semantics<parallel>], iteration_bounds = array<i64: 4>, scalar_prefetch = 0 : i64, scratch_operands = 0 : i64, tpu.core_type = #tpu.core_type<tc>, window_params = [{transform_indices = @transform_0, window_bounds = array<i64: 128, 32>}, {pipeline_mode = #tpu.pipeline_mode<synchronous>, transform_indices = @transform_1, window_bounds = array<i64: 32, 64>}, {pipeline_mode = #tpu.pipeline_mode<synchronous>, transform_indices = @transform_2, window_bounds = array<i64: 1, 64>}, {pipeline_mode = #tpu.pipeline_mode<synchronous>, transform_indices = @transform_3, window_bounds = array<i64: 64, 32>}, {pipeline_mode = #tpu.pipeline_mode<synchronous>, transform_indices = @transform_4, window_bounds = array<i64: 1, 32>}, {pipeline_mode = #tpu.pipeline_mode<synchronous>, transform_indices = @transform_5, window_bounds = array<i64: 32, 1>}, {pipeline_mode = #tpu.pipeline_mode<synchronous>, transform_indices = @transform_6, window_bounds = array<i64: 1, 1>}, {transform_indices = @transform_7, window_bounds = array<i64: 1, 128>}]} {
    %c0 = arith.constant 0 : index
    %c0_0 = arith.constant 0 : index
    %0 = vector.load %arg1[%c0, %c0_0] : memref<128x32xf32, #tpu.memory_space<vmem>>, vector<128x32xf32>
    %c0_1 = arith.constant 0 : index
    %c0_2 = arith.constant 0 : index
    %1 = vector.load %arg2[%c0_1, %c0_2] : memref<32x64xf32, #tpu.memory_space<vmem>>, vector<32x64xf32>
    %c0_3 = arith.constant 0 : index
    %c0_4 = arith.constant 0 : index
    %2 = vector.load %arg4[%c0_3, %c0_4] : memref<64x32xf32, #tpu.memory_space<vmem>>, vector<64x32xf32>
    %cst = arith.constant dense<0.000000e+00> : vector<128x64xf32>
    %3 = tpu.matmul %0, %1, %cst {dimension_numbers = #tpu.dot_dimension_numbers<[1], [0], [0], [1], [0, 0, 1, 1], [], []>} : vector<128x32xf32>, vector<32x64xf32>, vector<128x64xf32> -> vector<128x64xf32>
    %c0_5 = arith.constant 0 : index
    %c0_6 = arith.constant 0 : index
    %4 = vector.load %arg3[%c0_5, %c0_6] : memref<1x64xf32, #tpu.memory_space<vmem>>, vector<1x64xf32>
    %5 = vector.broadcast %4 : vector<1x64xf32> to vector<128x64xf32>
    %6 = arith.addf %3, %5 : vector<128x64xf32>
    %cst_7 = arith.constant 0.000000e+00 : f32
    %7 = vector.broadcast %cst_7 : f32 to vector<128x64xf32>
    %8 = arith.maximumf %6, %7 : vector<128x64xf32>
    %cst_8 = arith.constant dense<0.000000e+00> : vector<128x32xf32>
    %9 = tpu.matmul %8, %2, %cst_8 {dimension_numbers = #tpu.dot_dimension_numbers<[1], [0], [0], [1], [0, 0, 1, 1], [], []>} : vector<128x64xf32>, vector<64x32xf32>, vector<128x32xf32> -> vector<128x32xf32>
    %c0_9 = arith.constant 0 : index
    %c0_10 = arith.constant 0 : index
    %10 = vector.load %arg5[%c0_9, %c0_10] : memref<1x32xf32, #tpu.memory_space<vmem>>, vector<1x32xf32>
    %11 = vector.broadcast %10 : vector<1x32xf32> to vector<128x32xf32>
    %12 = arith.addf %9, %11 : vector<128x32xf32>
    %cst_11 = arith.constant 0.000000e+00 : f32
    %13 = vector.broadcast %cst_11 : f32 to vector<128x32xf32>
    %14 = arith.maximumf %12, %13 : vector<128x32xf32>
    %15 = tpu.transpose %14, [1, 0] : vector<128x32xf32> -> vector<32x128xf32>
    %c0_12 = arith.constant 0 : index
    %c0_13 = arith.constant 0 : index
    %16 = vector.load %arg6[%c0_12, %c0_13] : memref<32x1xf32, #tpu.memory_space<vmem>>, vector<32x1xf32>
    %17 = vector.broadcast %16 : vector<32x1xf32> to vector<32x128xf32>
    %18 = arith.mulf %15, %17 : vector<32x128xf32>
    %cst_14 = arith.constant dense<0.000000e+00> : vector<128xf32>
    %19 = vector.multi_reduction <add>, %18, %cst_14 [0] : vector<32x128xf32> to vector<128xf32>
    %20 = vector.shape_cast %19 : vector<128xf32> to vector<1x128xf32>
    %c0_15 = arith.constant 0 : index
    %c0_16 = arith.constant 0 : index
    %21 = vector.load %arg7[%c0_15, %c0_16] : memref<1x1xf32, #tpu.memory_space<vmem>>, vector<1x1xf32>
    %22 = vector.broadcast %21 : vector<1x1xf32> to vector<1x128xf32>
    %23 = arith.addf %20, %22 : vector<1x128xf32>
    %24 = arith.negf %23 : vector<1x128xf32>
    %25 = math.exp %24 : vector<1x128xf32>
    %cst_17 = arith.constant 1.000000e+00 : f32
    %26 = vector.broadcast %cst_17 : f32 to vector<1x128xf32>
    %27 = arith.addf %26, %25 : vector<1x128xf32>
    %28 = arith.divf %26, %27 : vector<1x128xf32>
    %c0_18 = arith.constant 0 : index
    %c0_19 = arith.constant 0 : index
    %29 = vector.load %arg8[%c0_18, %c0_19] : memref<1x128xf32, #tpu.memory_space<vmem>>, vector<1x128xf32>
    tpu.vector_store %arg8[%c0_18, %c0_19], %28 {strides = array<i32>} : memref<1x128xf32, #tpu.memory_space<vmem>>, vector<1x128xf32>,
    return
  }
  func.func @transform_0(%arg0: i32) -> (i32, i32) {
    %c0_i32 = arith.constant 0 : i32
    %c0_i32_0 = arith.constant 0 : i32
    return %arg0, %c0_i32 : i32, i32
  }
  func.func @transform_1(%arg0: i32) -> (i32, i32) {
    %c0_i32 = arith.constant 0 : i32
    %c0_i32_0 = arith.constant 0 : i32
    %c0_i32_1 = arith.constant 0 : i32
    return %c0_i32, %c0_i32_0 : i32, i32
  }
  func.func @transform_2(%arg0: i32) -> (i32, i32) {
    %c0_i32 = arith.constant 0 : i32
    %c0_i32_0 = arith.constant 0 : i32
    %c0_i32_1 = arith.constant 0 : i32
    return %c0_i32, %c0_i32_0 : i32, i32
  }
  func.func @transform_3(%arg0: i32) -> (i32, i32) {
    %c0_i32 = arith.constant 0 : i32
    %c0_i32_0 = arith.constant 0 : i32
    %c0_i32_1 = arith.constant 0 : i32
    return %c0_i32, %c0_i32_0 : i32, i32
  }
  func.func @transform_4(%arg0: i32) -> (i32, i32) {
    %c0_i32 = arith.constant 0 : i32
    %c0_i32_0 = arith.constant 0 : i32
    %c0_i32_1 = arith.constant 0 : i32
    return %c0_i32, %c0_i32_0 : i32, i32
  }
  func.func @transform_5(%arg0: i32) -> (i32, i32) {
    %c0_i32 = arith.constant 0 : i32
    %c0_i32_0 = arith.constant 0 : i32
    %c0_i32_1 = arith.constant 0 : i32
    return %c0_i32, %c0_i32_0 : i32, i32
  }
  func.func @transform_6(%arg0: i32) -> (i32, i32) {
    %c0_i32 = arith.constant 0 : i32
    %c0_i32_0 = arith.constant 0 : i32
    %c0_i32_1 = arith.constant 0 : i32
    return %c0_i32, %c0_i32_0 : i32, i32
  }
  func.func @transform_7(%arg0: i32) -> (i32, i32) {
    %c0_i32 = arith.constant 0 : i32
    %c0_i32_0 = arith.constant 0 : i32
    return %c0_i32, %arg0 : i32, i32
  }
}

</mosaic_0001>

<llo_original>
// kernel: tpu_custom_call.1
$region0: #{tpu_custom_call.1}
  #allocation0 [shape = 'u32[]', space=smem, size = 0x4, offset = 0x4, fixed_abs, tag = 'smem constant byte address 0x4 - core index']
  #allocation1 [shape = 'u32[144,128]{1,0:T(1,128)}', space=vmem, size = 0x12000, scoped, tag = 'internal scratch']
  #allocation2 [shape = 'f32[1,1]{1,0:T(1,128)S(1)}', space=vmem, size = 0x200, scoped, tag = 'scoped memory for tpu_custom_call.1']
  %s0 = inlined_call_operand.vmem [shape: f32[512,32], index: 0, kind: input, shape index: {}]
  %s1 = inlined_call_operand.vmem [shape: f32[32,64], index: 1, kind: input, shape index: {}]
  %s2 = inlined_call_operand.vmem [shape: f32[1,64], index: 2, kind: input, shape index: {}]
  %s3 = inlined_call_operand.vmem [shape: f32[64,32], index: 3, kind: input, shape index: {}]
  %s4 = inlined_call_operand.vmem [shape: f32[1,32], index: 4, kind: input, shape index: {}]
  %s5 = inlined_call_operand.vmem [shape: f32[32,1], index: 5, kind: input, shape index: {}]
  %s6 = inlined_call_operand.<no memory space> [shape: f32[1,1], index: 6, kind: input, shape index: {}]
  %s7 = inlined_call_operand.hbm [shape: f32[1,512], index: 7, kind: output, shape index: {}]
  %s8 = sld [smem:[#allocation0]]
  $region61: #{tpu_custom_call.1} parent=0
    _
  %s10 = ssub.s32 1, %s8
  %s11 = scalar_select 0, %s10, %s8
  %v12 = vstv %s6
  %13 = vst [vmem:[#allocation2] sm:$0x1] %v12
  $region1: #{tpu_custom_call.1} parent=0
    #allocation3 [shape = 'u8[1024]{0}', space=vmem, size = 0x400, scoped, tag = 'output window, operand 0']
    #allocation4 [shape = 's32[2]{0}', space=sflag, size = 0x8, scoped, tag = 'scoped memory for tpu_custom_call.1']
    %14 = vsyncpa [#allocation4], 0
    %s15 = scalar_lea.sflag [#allocation4], 1
    %16 = vsyncpa %s15, 0
    loop: start=0, step=1, limit=6
    $region2: #{tpu_custom_call.1} parent=1 // loop_pre_header
      _
    $region3: #{tpu_custom_call.1} parent=1 // loop_header
      %s18 = sphi 0, %s22
      %p19 = scmp.ge.s32.totalorder %s18, 6
      %s28 = sphi 0, %s30
      %s31 = sphi 0, %s28
      %s32 = sphi 0, %s31
      %s48 = sphi 0, %s32
      %s52 = sphi 0, %s52
      %s54 = sphi 0, %s52
      %s55 = sphi 0, %s54
      %s69 = sphi 0, %s55
      %s73 = sphi 0, %s73
      %s75 = sphi 0, %s73
      %s76 = sphi 0, %s75
      %s90 = sphi 0, %s76
      %s94 = sphi 0, %s94
      %s96 = sphi 0, %s94
      %s97 = sphi 0, %s96
      %s111 = sphi 0, %s97
      %s115 = sphi 0, %s115
      %s117 = sphi 0, %s115
      %s118 = sphi 0, %s117
      %s132 = sphi 0, %s118
      %s136 = sphi 0, %s136
      %s138 = sphi 0, %s136
      %s139 = sphi 0, %s138
      %s153 = sphi 0, %s139
      %s157 = sphi 0, %s157
      %s159 = sphi 0, %s157
      %s160 = sphi 0, %s159
      %s174 = sphi 0, %s160
      %s180 = sphi 0, %s182
      %s183 = sphi 0, %s180
      %s184 = sphi 0, %s183
      %s200 = sphi 0, %s184
    $region4: #{tpu_custom_call.1} parent=1 // loop_header_branch
      %21 = sbr.rel (%p19) target = $region8
    $region5: #{tpu_custom_call.1} parent=1 // loop_body
      %s23 = ssub.s32 %s18, 1
      %s24 = ssub.s32 %s18, 2
      %s25 = sadd.s32 %s18, 1
      %s26 = ssub.s32 %s18, %s25
      %p27 = scmp.eq.s32.totalorder %s26, 0
      %s29 = sadd.s32 %s28, 1
      %s30 = scalar_select %p27, %s28, %s29
      %p33 = pneg %p27
      %p34 = scmp.eq.s32.totalorder %s18, 3
      %p35 = por %p33, %p34
      %p36 = scmp.ne.s32.totalorder %s28, %s31
      %p37 = scmp.eq.s32.totalorder %s18, 0
      %p38 = por %p36, %p37
      %p39 = scmp.ne.s32.totalorder %s28, %s31
      %p40 = scmp.eq.s32.totalorder %s23, 3
      %p41 = por %p39, %p40
      %p42 = scmp.ne.s32.totalorder %s31, %s32
      %p43 = scmp.eq.s32.totalorder %s23, 0
      %p44 = por %p42, %p43
      %p45 = scmp.ne.s32.totalorder %s31, %s32
      %p46 = scmp.eq.s32.totalorder %s24, 3
      %p47 = por %p45, %p46
      %p49 = scmp.ne.s32.totalorder %s32, %s48
      %p50 = scmp.eq.s32.totalorder %s24, 0
      %p51 = por %p49, %p50
      %s53 = sadd.s32 %s52, 1
      %p56 = scmp.eq.s32.totalorder %s18, 3
      %p57 = scmp.ne.s32.totalorder %s52, %s54
      %p58 = scmp.eq.s32.totalorder %s18, 0
      %p59 = por %p57, %p58
      %p60 = scmp.ne.s32.totalorder %s52, %s54
      %p61 = scmp.eq.s32.totalorder %s23, 3
      %p62 = por %p60, %p61
      %p63 = scmp.ne.s32.totalorder %s54, %s55
      %p64 = scmp.eq.s32.totalorder %s23, 0
      %p65 = por %p63, %p64
      %p66 = scmp.ne.s32.totalorder %s54, %s55
      %p67 = scmp.eq.s32.totalorder %s24, 3
      %p68 = por %p66, %p67
      %p70 = scmp.ne.s32.totalorder %s55, %s69
      %p71 = scmp.eq.s32.totalorder %s24, 0
      %p72 = por %p70, %p71
      %s74 = sadd.s32 %s73, 1
      %p77 = scmp.eq.s32.totalorder %s18, 3
      %p78 = scmp.ne.s32.totalorder %s73, %s75
      %p79 = scmp.eq.s32.totalorder %s18, 0
      %p80 = por %p78, %p79
      %p81 = scmp.ne.s32.totalorder %s73, %s75
      %p82 = scmp.eq.s32.totalorder %s23, 3
      %p83 = por %p81, %p82
      %p84 = scmp.ne.s32.totalorder %s75, %s76
      %p85 = scmp.eq.s32.totalorder %s23, 0
      %p86 = por %p84, %p85
      %p87 = scmp.ne.s32.totalorder %s75, %s76
      %p88 = scmp.eq.s32.totalorder %s24, 3
      %p89 = por %p87, %p88
      %p91 = scmp.ne.s32.totalorder %s76, %s90
      %p92 = scmp.eq.s32.totalorder %s24, 0
      %p93 = por %p91, %p92
      %s95 = sadd.s32 %s94, 1
      %p98 = scmp.eq.s32.totalorder %s18, 3
      %p99 = scmp.ne.s32.totalorder %s94, %s96
      %p100 = scmp.eq.s32.totalorder %s18, 0
      %p101 = por %p99, %p100
      %p102 = scmp.ne.s32.totalorder %s94, %s96
      %p103 = scmp.eq.s32.totalorder %s23, 3
      %p104 = por %p102, %p103
      %p105 = scmp.ne.s32.totalorder %s96, %s97
      %p106 = scmp.eq.s32.totalorder %s23, 0
      %p107 = por %p105, %p106
      %p108 = scmp.ne.s32.totalorder %s96, %s97
      %p109 = scmp.eq.s32.totalorder %s24, 3
      %p110 = por %p108, %p109
      %p112 = scmp.ne.s32.totalorder %s97, %s111
      %p113 = scmp.eq.s32.totalorder %s24, 0
      %p114 = por %p112, %p113
      %s116 = sadd.s32 %s115, 1
      %p119 = scmp.eq.s32.totalorder %s18, 3
      %p120 = scmp.ne.s32.totalorder %s115, %s117
      %p121 = scmp.eq.s32.totalorder %s18, 0
      %p122 = por %p120, %p121
      %p123 = scmp.ne.s32.totalorder %s115, %s117
      %p124 = scmp.eq.s32.totalorder %s23, 3
      %p125 = por %p123, %p124
      %p126 = scmp.ne.s32.totalorder %s117, %s118
      %p127 = scmp.eq.s32.totalorder %s23, 0
      %p128 = por %p126, %p127
      %p129 = scmp.ne.s32.totalorder %s117, %s118
      %p130 = scmp.eq.s32.totalorder %s24, 3
      %p131 = por %p129, %p130
      %p133 = scmp.ne.s32.totalorder %s118, %s132
      %p134 = scmp.eq.s32.totalorder %s24, 0
      %p135 = por %p133, %p134
      %s137 = sadd.s32 %s136, 1
      %p140 = scmp.eq.s32.totalorder %s18, 3
      %p141 = scmp.ne.s32.totalorder %s136, %s138
      %p142 = scmp.eq.s32.totalorder %s18, 0
      %p143 = por %p141, %p142
      %p144 = scmp.ne.s32.totalorder %s136, %s138
      %p145 = scmp.eq.s32.totalorder %s23, 3
      %p146 = por %p144, %p145
      %p147 = scmp.ne.s32.totalorder %s138, %s139
      %p148 = scmp.eq.s32.totalorder %s23, 0
      %p149 = por %p147, %p148
      %p150 = scmp.ne.s32.totalorder %s138, %s139
      %p151 = scmp.eq.s32.totalorder %s24, 3
      %p152 = por %p150, %p151
      %p154 = scmp.ne.s32.totalorder %s139, %s153
      %p155 = scmp.eq.s32.totalorder %s24, 0
      %p156 = por %p154, %p155
      %s158 = sadd.s32 %s157, 1
      %p161 = scmp.eq.s32.totalorder %s18, 3
      %p162 = scmp.ne.s32.totalorder %s157, %s159
      %p163 = scmp.eq.s32.totalorder %s18, 0
      %p164 = por %p162, %p163
      %p165 = scmp.ne.s32.totalorder %s157, %s159
      %p166 = scmp.eq.s32.totalorder %s23, 3
      %p167 = por %p165, %p166
      %p168 = scmp.ne.s32.totalorder %s159, %s160
      %p169 = scmp.eq.s32.totalorder %s23, 0
      %p170 = por %p168, %p169
      %p171 = scmp.ne.s32.totalorder %s159, %s160
      %p172 = scmp.eq.s32.totalorder %s24, 3
      %p173 = por %p171, %p172
      %p175 = scmp.ne.s32.totalorder %s160, %s174
      %p176 = scmp.eq.s32.totalorder %s24, 0
      %p177 = por %p175, %p176
      %s178 = ssub.s32 %s18, %s25
      %p179 = scmp.eq.s32.totalorder %s178, 0
      %s181 = sadd.s32 %s180, 1
      %s182 = scalar_select %p179, %s180, %s181
      %p185 = pneg %p179
      %p186 = scmp.eq.s32.totalorder %s18, 3
      %p187 = por %p185, %p186
      %p188 = scmp.ne.s32.totalorder %s180, %s183
      %p189 = scmp.eq.s32.totalorder %s18, 0
      %p190 = por %p188, %p189
      %p191 = scmp.ne.s32.totalorder %s180, %s183
      %p192 = scmp.eq.s32.totalorder %s23, 3
      %p193 = por %p191, %p192
      %p194 = scmp.ne.s32.totalorder %s183, %s184
      %p195 = scmp.eq.s32.totalorder %s23, 0
      %p196 = por %p194, %p195
      %p197 = scmp.ne.s32.totalorder %s183, %s184
      %p198 = scmp.eq.s32.totalorder %s24, 3
      %p199 = por %p197, %p198
      %p201 = scmp.ne.s32.totalorder %s184, %s200
      %p202 = scmp.eq.s32.totalorder %s24, 0
      %p203 = por %p201, %p202
      %p204 = scmp.le.s32.totalorder 1, %s18
      %p205 = scmp.lt.s32.totalorder %s18, 5
      %p206 = pnand %p204, %p205
      %p207 = pneg %p206
      // Predicated region
      $region9: #{tpu_custom_call.1} parent=5 // pred_check
        _
      $region10: #{tpu_custom_call.1} parent=5 // pred_check_branch
        %209 = sbr.rel (%p206) target = $region12
      $region11: #{tpu_custom_call.1} parent=5 // pred_region
        %s210 = ssub.s32 %s18, 1
        // Predicated region
        $region13: #{tpu_custom_call.1} parent=11 // pred_check
          %p211 = pneg %p65
        $region14: #{tpu_custom_call.1} parent=11 // pred_check_branch
          %213 = sbr.rel (%p211) target = $region16
        $region15: #{tpu_custom_call.1} parent=11 // pred_region
          _
        $region16: #{tpu_custom_call.1} parent=11 // pred_fallthru
          _
        // Predicated region
        $region17: #{tpu_custom_call.1} parent=11 // pred_check
          %p214 = pneg %p86
        $region18: #{tpu_custom_call.1} parent=11 // pred_check_branch
          %216 = sbr.rel (%p214) target = $region20
        $region19: #{tpu_custom_call.1} parent=11 // pred_region
          _
        $region20: #{tpu_custom_call.1} parent=11 // pred_fallthru
          _
        // Predicated region
        $region21: #{tpu_custom_call.1} parent=11 // pred_check
          %p217 = pneg %p107
        $region22: #{tpu_custom_call.1} parent=11 // pred_check_branch
          %219 = sbr.rel (%p217) target = $region24
        $region23: #{tpu_custom_call.1} parent=11 // pred_region
          _
        $region24: #{tpu_custom_call.1} parent=11 // pred_fallthru
          _
        // Predicated region
        $region25: #{tpu_custom_call.1} parent=11 // pred_check
          %p220 = pneg %p128
        $region26: #{tpu_custom_call.1} parent=11 // pred_check_branch
          %222 = sbr.rel (%p220) target = $region28
        $region27: #{tpu_custom_call.1} parent=11 // pred_region
          _
        $region28: #{tpu_custom_call.1} parent=11 // pred_fallthru
          _
        // Predicated region
        $region29: #{tpu_custom_call.1} parent=11 // pred_check
          %p223 = pneg %p149
        $region30: #{tpu_custom_call.1} parent=11 // pred_check_branch
          %225 = sbr.rel (%p223) target = $region32
        $region31: #{tpu_custom_call.1} parent=11 // pred_region
          _
        $region32: #{tpu_custom_call.1} parent=11 // pred_fallthru
          _
        // Predicated region
        $region33: #{tpu_custom_call.1} parent=11 // pred_check
          %p226 = pneg %p170
        $region34: #{tpu_custom_call.1} parent=11 // pred_check_branch
          %228 = sbr.rel (%p226) target = $region36
        $region35: #{tpu_custom_call.1} parent=11 // pred_region
          _
        $region36: #{tpu_custom_call.1} parent=11 // pred_fallthru
          _
      $region12: #{tpu_custom_call.1} parent=5 // pred_fallthru
        _
      %p229 = scmp.lt.s32.totalorder %s18, 4
      // Predicated region
      $region37: #{tpu_custom_call.1} parent=5 // pred_check
        %p230 = pneg %p229
      $region38: #{tpu_custom_call.1} parent=5 // pred_check_branch
        %232 = sbr.rel (%p230) target = $region40
      $region39: #{tpu_custom_call.1} parent=5 // pred_region
        // Predicated region
        $region41: #{tpu_custom_call.1} parent=39 // pred_check
          %p233 = pneg %p38
        $region42: #{tpu_custom_call.1} parent=39 // pred_check_branch
          %235 = sbr.rel (%p233) target = $region44
        $region43: #{tpu_custom_call.1} parent=39 // pred_region
          %s236 = smul.u32 16, %s18
          %p237 = scmp.lt.s32.totalorder %s236, 63
          %s238 = scalar_select %p237, %s236, 63
          %s239 = smul.addr %s238, 8
          %s240 = scalar_lea.vmem %s0, %s239
          %s241 = smul.u32 16, %s18
        $region44: #{tpu_custom_call.1} parent=39 // pred_fallthru
          _
      $region40: #{tpu_custom_call.1} parent=5 // pred_fallthru
        _
      %p242 = scmp.le.s32.totalorder 1, %s18
      %p243 = scmp.lt.s32.totalorder %s18, 5
      %p244 = pnand %p242, %p243
      %p245 = pneg %p244
      // Predicated region
      $region45: #{tpu_custom_call.1} parent=5 // pred_check
        _
      $region46: #{tpu_custom_call.1} parent=5 // pred_check_branch
        %247 = sbr.rel (%p244) target = $region48
      $region47: #{tpu_custom_call.1} parent=5 // pred_region
        %s248 = ssub.s32 %s18, 1
        %s249 = smul.u32 16, %s23
        %p250 = scmp.lt.s32.totalorder %s249, 63
        %s251 = scalar_select %p250, %s249, 63
        %s252 = smul.addr %s251, 8
        %s253 = scalar_lea.vmem %s0, %s252
        %p254 = pneg %p44
        %p255 = pneg %p41
        %p256 = pneg %p65
        %p257 = pneg %p62
        %p258 = pneg %p86
        %p259 = pneg %p83
        %p260 = pneg %p107
        %p261 = pneg %p104
        %p262 = pneg %p128
        %p263 = pneg %p125
        %p264 = pneg %p149
        %p265 = pneg %p146
        %p266 = pneg %p170
        %p267 = pneg %p167
        %p268 = pneg %p196
        %p269 = pneg %p193
        %s270 = sand.u32 %s183, 1
        %s271 = scalar_lea.sflag [#allocation4], %s270
        %s272 = sand.u32 %s183, 1
        %s273 = scalar_lea.vmem [#allocation3], %s272
        %s274 = smul.u32 16, %s23
        %p275 = scmp.lt.s32.totalorder %s274, 63
        %s276 = scalar_select %p275, %s274, 63
        %s277 = smul.addr %s276, 8
        %s278 = scalar_lea.vmem %s0, %s277
        %s279 = smul.u32 16, %s23
        %v280 = vld [vmem:[%s278] sm:$0xff]
        %v281 = vld [vmem:[%s278 + $0x8] sm:$0xff]
        %v282 = vld [vmem:[%s278 + $0x10] sm:$0xff]
        %v283 = vld [vmem:[%s278 + $0x18] sm:$0xff]
        %v284 = vld [vmem:[%s278 + $0x20] sm:$0xff]
        %v285 = vld [vmem:[%s278 + $0x28] sm:$0xff]
        %v286 = vld [vmem:[%s278 + $0x30] sm:$0xff]
        %v287 = vld [vmem:[%s278 + $0x38] sm:$0xff]
        %v288 = vld [vmem:[%s278 + $0x40] sm:$0xff]
        %v289 = vld [vmem:[%s278 + $0x48] sm:$0xff]
        %v290 = vld [vmem:[%s278 + $0x50] sm:$0xff]
        %v291 = vld [vmem:[%s278 + $0x58] sm:$0xff]
        %v292 = vld [vmem:[%s278 + $0x60] sm:$0xff]
        %v293 = vld [vmem:[%s278 + $0x68] sm:$0xff]
        %v294 = vld [vmem:[%s278 + $0x70] sm:$0xff]
        %v295 = vld [vmem:[%s278 + $0x78] sm:$0xff]
        %v296 = vld [vmem:[%s1] sm:$0xff]
        %v297 = vld [vmem:[%s1 + $0x8] sm:$0xff]
        %v298 = vld [vmem:[%s1 + $0x10] sm:$0xff]
        %v299 = vld [vmem:[%s1 + $0x18] sm:$0xff]
        %v300 = vld [vmem:[%s3] sm:$0xff]
        %v301 = vld [vmem:[%s3 + $0x8] sm:$0xff]
        %v302 = vld [vmem:[%s3 + $0x10] sm:$0xff]
        %v303 = vld [vmem:[%s3 + $0x18] sm:$0xff]
        %v304 = vld [vmem:[%s3 + $0x20] sm:$0xff]
        %v305 = vld [vmem:[%s3 + $0x28] sm:$0xff]
        %v306 = vld [vmem:[%s3 + $0x30] sm:$0xff]
        %v307 = vld [vmem:[%s3 + $0x38] sm:$0xff]
        %v308 = vld [vmem:[%s2] sm:$0x1]
        %v310 = vlaneseq
        %v311 = vshrl.u32 %v310, 7
        %v312 = vsub.s32 0, %v311
        %v313 = vrot.slane %v308, %v312
        %vm315 = vcmask 261120
        %v317 = vsel %vm315, %v280, 0
        %v320 = vsel %vm315, %v281, 0
        %v323 = vsel %vm315, %v282, 0
        %v326 = vsel %vm315, %v283, 0
        %v329 = vsel %vm315, %v284, 0
        %v332 = vsel %vm315, %v285, 0
        %v335 = vsel %vm315, %v286, 0
        %v338 = vsel %vm315, %v287, 0
        %v341 = vsel %vm315, %v288, 0
        %v344 = vsel %vm315, %v289, 0
        %v347 = vsel %vm315, %v290, 0
        %v350 = vsel %vm315, %v291, 0
        %v353 = vsel %vm315, %v292, 0
        %v356 = vsel %vm315, %v293, 0
        %v359 = vsel %vm315, %v294, 0
        %v362 = vsel %vm315, %v295, 0
        %364 = vmatprep.subr.mxu0 0.0
        %365 = vmatpush1.msra.mxu0 0.0
        %366 = vmatprep.subr.mxu0 0.0
        %367 = vmatpush1.msra.mxu0 0.0
        %368 = vmatprep.subr.mxu0 0.0
        %369 = vmatpush1.msra.mxu0 0.0
        %370 = vmatprep.subr.mxu0 0.0
        %371 = vmatpush1.msra.mxu0 0.0
        %372 = vmatprep.subr.mxu0 0.0
        %373 = vmatpush1.msra.mxu0 0.0
        %374 = vmatprep.subr.mxu0 0.0
        %375 = vmatpush1.msra.mxu0 0.0
        %376 = vmatprep.subr.mxu0 0.0
        %377 = vmatpush1.msra.mxu0 0.0
        %378 = vmatprep.subr.mxu0 0.0
        %379 = vmatpush1.msra.mxu0 0.0
        %380 = vmatprep.subr.mxu0 0.0
        %381 = vmatpush1.msra.mxu0 0.0
        %382 = vmatprep.subr.mxu0 0.0
        %383 = vmatpush1.msra.mxu0 0.0
        %384 = vmatprep.subr.mxu0 0.0
        %385 = vmatpush1.msra.mxu0 0.0
        %386 = vmatprep.subr.mxu0 0.0
        %387 = vmatpush1.msra.mxu0 0.0
        %388 = vmatprep.subr.mxu0 0.0
        %389 = vmatpush1.msra.mxu0 %v299
        %390 = vmatprep.subr.mxu0 0.0
        %391 = vmatpush1.msra.mxu0 %v298
        %392 = vmatprep.subr.mxu0 0.0
        %393 = vmatpush1.msra.mxu0 %v297
        %394 = vmatprep.subr.mxu0 0.0
        %395 = vmatpush1.msra.mxu0 %v296
        %396 = vmatprep.subr.mxu0 0.0
        %397 = vmatpush2.msra.mxu0 0.0
        %398 = vmatprep.subr.mxu0 0.0
        %399 = vmatpush2.msra.mxu0 0.0
        %400 = vmatprep.subr.mxu0 0.0
        %401 = vmatpush2.msra.mxu0 0.0
        %402 = vmatprep.subr.mxu0 0.0
        %403 = vmatpush2.msra.mxu0 0.0
        %404 = vmatprep.subr.mxu0 0.0
        %405 = vmatpush2.msra.mxu0 0.0
        %406 = vmatprep.subr.mxu0 0.0
        %407 = vmatpush2.msra.mxu0 0.0
        %408 = vmatprep.subr.mxu0 0.0
        %409 = vmatpush2.msra.mxu0 0.0
        %410 = vmatprep.subr.mxu0 0.0
        %411 = vmatpush2.msra.mxu0 0.0
        %412 = vmatprep.subr.mxu0 0.0
        %413 = vmatpush2.msra.mxu0 0.0
        %414 = vmatprep.subr.mxu0 0.0
        %415 = vmatpush2.msra.mxu0 0.0
        %416 = vmatprep.subr.mxu0 0.0
        %417 = vmatpush2.msra.mxu0 0.0
        %418 = vmatprep.subr.mxu0 0.0
        %419 = vmatpush2.msra.mxu0 0.0
        %420 = vmatprep.subr.mxu0 0.0
        %421 = vmatpush2.msra.mxu0 0.0
        %422 = vmatprep.subr.mxu0 0.0
        %423 = vmatpush2.msra.mxu0 0.0
        %424 = vmatprep.subr.mxu0 0.0
        %425 = vmatpush2.msra.mxu0 0.0
        %426 = vmatprep.subr.mxu0 0.0
        %427 = vmatpush2.msra.mxu0 0.0
        %428 = vmatprep.mubr.f32.mxu0 0.0
        %429 = vmatmul.mubr.f32.gmra.mxu0 %v317
        %v430 = vpop.f32.mrf.mxu0
        %v431 = vadd.f32 %v313, %v430
        %v432 = vpop.f32.mrf.mxu0
        %433 = vmatprep.mubr.f32.mxu0 0.0
        %434 = vmatmul.mubr.f32.gmra.mxu0 %v320
        %v435 = vpop.f32.mrf.mxu0
        %v436 = vadd.f32 %v313, %v435
        %v437 = vpop.f32.mrf.mxu0
        %438 = vmatprep.mubr.f32.mxu0 0.0
        %439 = vmatmul.mubr.f32.gmra.mxu0 %v323
        %v440 = vpop.f32.mrf.mxu0
        %v441 = vadd.f32 %v313, %v440
        %v442 = vpop.f32.mrf.mxu0
        %443 = vmatprep.mubr.f32.mxu0 0.0
        %444 = vmatmul.mubr.f32.gmra.mxu0 %v326
        %v445 = vpop.f32.mrf.mxu0
        %v446 = vadd.f32 %v313, %v445
        %v447 = vpop.f32.mrf.mxu0
        %448 = vmatprep.mubr.f32.mxu0 0.0
        %449 = vmatmul.mubr.f32.gmra.mxu0 %v329
        %v450 = vpop.f32.mrf.mxu0
        %v451 = vadd.f32 %v313, %v450
        %v452 = vpop.f32.mrf.mxu0
        %453 = vmatprep.mubr.f32.mxu0 0.0
        %454 = vmatmul.mubr.f32.gmra.mxu0 %v332
        %v455 = vpop.f32.mrf.mxu0
        %v456 = vadd.f32 %v313, %v455
        %v457 = vpop.f32.mrf.mxu0
        %458 = vmatprep.mubr.f32.mxu0 0.0
        %459 = vmatmul.mubr.f32.gmra.mxu0 %v335
        %v460 = vpop.f32.mrf.mxu0
        %v461 = vadd.f32 %v313, %v460
        %v462 = vpop.f32.mrf.mxu0
        %463 = vmatprep.mubr.f32.mxu0 0.0
        %464 = vmatmul.mubr.f32.gmra.mxu0 %v338
        %v465 = vpop.f32.mrf.mxu0
        %v466 = vadd.f32 %v313, %v465
        %v467 = vpop.f32.mrf.mxu0
        %468 = vmatprep.mubr.f32.mxu0 0.0
        %469 = vmatmul.mubr.f32.gmra.mxu0 %v341
        %v470 = vpop.f32.mrf.mxu0
        %v471 = vadd.f32 %v313, %v470
        %v472 = vpop.f32.mrf.mxu0
        %473 = vmatprep.mubr.f32.mxu0 0.0
        %474 = vmatmul.mubr.f32.gmra.mxu0 %v344
        %v475 = vpop.f32.mrf.mxu0
        %v476 = vadd.f32 %v313, %v475
        %v477 = vpop.f32.mrf.mxu0
        %478 = vmatprep.mubr.f32.mxu0 0.0
        %479 = vmatmul.mubr.f32.gmra.mxu0 %v347
        %v480 = vpop.f32.mrf.mxu0
        %v481 = vadd.f32 %v313, %v480
        %v482 = vpop.f32.mrf.mxu0
        %483 = vmatprep.mubr.f32.mxu0 0.0
        %484 = vmatmul.mubr.f32.gmra.mxu0 %v350
        %v485 = vpop.f32.mrf.mxu0
        %v486 = vadd.f32 %v313, %v485
        %v487 = vpop.f32.mrf.mxu0
        %488 = vmatprep.mubr.f32.mxu0 0.0
        %489 = vmatmul.mubr.f32.gmra.mxu0 %v353
        %v490 = vpop.f32.mrf.mxu0
        %v491 = vadd.f32 %v313, %v490
        %v492 = vpop.f32.mrf.mxu0
        %493 = vmatprep.mubr.f32.mxu0 0.0
        %494 = vmatmul.mubr.f32.gmra.mxu0 %v356
        %v495 = vpop.f32.mrf.mxu0
        %v496 = vadd.f32 %v313, %v495
        %v497 = vpop.f32.mrf.mxu0
        %498 = vmatprep.mubr.f32.mxu0 0.0
        %499 = vmatmul.mubr.f32.gmra.mxu0 %v359
        %v500 = vpop.f32.mrf.mxu0
        %v501 = vadd.f32 %v313, %v500
        %v502 = vpop.f32.mrf.mxu0
        %503 = vmatprep.mubr.f32.mxu0 0.0
        %504 = vmatmul.mubr.f32.gmra.mxu0 %v362
        %v505 = vpop.f32.mrf.mxu0
        %v506 = vadd.f32 %v313, %v505
        %v507 = vpop.f32.mrf.mxu0
        %508 = vdwg.mxu0
        %v509 = vmax.f32 %v431, 0.0
        %v510 = vmax.f32 %v436, 0.0
        %v511 = vmax.f32 %v441, 0.0
        %v512 = vmax.f32 %v446, 0.0
        %v513 = vmax.f32 %v451, 0.0
        %v514 = vmax.f32 %v456, 0.0
        %v515 = vmax.f32 %v461, 0.0
        %v516 = vmax.f32 %v466, 0.0
        %v517 = vmax.f32 %v471, 0.0
        %v518 = vmax.f32 %v476, 0.0
        %v519 = vmax.f32 %v481, 0.0
        %v520 = vmax.f32 %v486, 0.0
        %v521 = vmax.f32 %v491, 0.0
        %v522 = vmax.f32 %v496, 0.0
        %v523 = vmax.f32 %v501, 0.0
        %v524 = vmax.f32 %v506, 0.0
        %v525 = vld [vmem:[%s4] sm:$0x1]
        %v527 = vlaneseq
        %v528 = vshrl.u32 %v527, 7
        %v529 = vsub.s32 0, %v528
        %v530 = vrot.slane %v525, %v529
        %vm532 = vcmask 523264
        %v534 = vsel %vm532, %v509, 0
        %v537 = vsel %vm532, %v510, 0
        %v540 = vsel %vm532, %v511, 0
        %v543 = vsel %vm532, %v512, 0
        %v546 = vsel %vm532, %v513, 0
        %v549 = vsel %vm532, %v514, 0
        %v552 = vsel %vm532, %v515, 0
        %v555 = vsel %vm532, %v516, 0
        %v558 = vsel %vm532, %v517, 0
        %v561 = vsel %vm532, %v518, 0
        %v564 = vsel %vm532, %v519, 0
        %v567 = vsel %vm532, %v520, 0
        %v570 = vsel %vm532, %v521, 0
        %v573 = vsel %vm532, %v522, 0
        %v576 = vsel %vm532, %v523, 0
        %v579 = vsel %vm532, %v524, 0
        %581 = vmatprep.subr.mxu0 0.0
        %582 = vmatpush1.msra.mxu0 0.0
        %583 = vmatprep.subr.mxu0 0.0
        %584 = vmatpush1.msra.mxu0 0.0
        %585 = vmatprep.subr.mxu0 0.0
        %586 = vmatpush1.msra.mxu0 0.0
        %587 = vmatprep.subr.mxu0 0.0
        %588 = vmatpush1.msra.mxu0 0.0
        %589 = vmatprep.subr.mxu0 0.0
        %590 = vmatpush1.msra.mxu0 0.0
        %591 = vmatprep.subr.mxu0 0.0
        %592 = vmatpush1.msra.mxu0 0.0
        %593 = vmatprep.subr.mxu0 0.0
        %594 = vmatpush1.msra.mxu0 0.0
        %595 = vmatprep.subr.mxu0 0.0
        %596 = vmatpush1.msra.mxu0 0.0
        %597 = vmatprep.subr.mxu0 0.0
        %598 = vmatpush1.msra.mxu0 %v307
        %599 = vmatprep.subr.mxu0 0.0
        %600 = vmatpush1.msra.mxu0 %v306
        %601 = vmatprep.subr.mxu0 0.0
        %602 = vmatpush1.msra.mxu0 %v305
        %603 = vmatprep.subr.mxu0 0.0
        %604 = vmatpush1.msra.mxu0 %v304
        %605 = vmatprep.subr.mxu0 0.0
        %606 = vmatpush1.msra.mxu0 %v303
        %607 = vmatprep.subr.mxu0 0.0
        %608 = vmatpush1.msra.mxu0 %v302
        %609 = vmatprep.subr.mxu0 0.0
        %610 = vmatpush1.msra.mxu0 %v301
        %611 = vmatprep.subr.mxu0 0.0
        %612 = vmatpush1.msra.mxu0 %v300
        %613 = vmatprep.subr.mxu0 0.0
        %614 = vmatpush2.msra.mxu0 0.0
        %615 = vmatprep.subr.mxu0 0.0
        %616 = vmatpush2.msra.mxu0 0.0
        %617 = vmatprep.subr.mxu0 0.0
        %618 = vmatpush2.msra.mxu0 0.0
        %619 = vmatprep.subr.mxu0 0.0
        %620 = vmatpush2.msra.mxu0 0.0
        %621 = vmatprep.subr.mxu0 0.0
        %622 = vmatpush2.msra.mxu0 0.0
        %623 = vmatprep.subr.mxu0 0.0
        %624 = vmatpush2.msra.mxu0 0.0
        %625 = vmatprep.subr.mxu0 0.0
        %626 = vmatpush2.msra.mxu0 0.0
        %627 = vmatprep.subr.mxu0 0.0
        %628 = vmatpush2.msra.mxu0 0.0
        %629 = vmatprep.subr.mxu0 0.0
        %630 = vmatpush2.msra.mxu0 0.0
        %631 = vmatprep.subr.mxu0 0.0
        %632 = vmatpush2.msra.mxu0 0.0
        %633 = vmatprep.subr.mxu0 0.0
        %634 = vmatpush2.msra.mxu0 0.0
        %635 = vmatprep.subr.mxu0 0.0
        %636 = vmatpush2.msra.mxu0 0.0
        %637 = vmatprep.subr.mxu0 0.0
        %638 = vmatpush2.msra.mxu0 0.0
        %639 = vmatprep.subr.mxu0 0.0
        %640 = vmatpush2.msra.mxu0 0.0
        %641 = vmatprep.subr.mxu0 0.0
        %642 = vmatpush2.msra.mxu0 0.0
        %643 = vmatprep.subr.mxu0 0.0
        %644 = vmatpush2.msra.mxu0 0.0
        %645 = vmatprep.mubr.f32.mxu0 0.0
        %646 = vmatmul.mubr.f32.gmra.mxu0 %v534
        %v647 = vpop.f32.mrf.mxu0
        %v648 = vadd.f32 %v530, %v647
        %v649 = vpop.f32.mrf.mxu0
        %650 = vmatprep.mubr.f32.mxu0 0.0
        %651 = vmatmul.mubr.f32.gmra.mxu0 %v537
        %v652 = vpop.f32.mrf.mxu0
        %v653 = vadd.f32 %v530, %v652
        %v654 = vpop.f32.mrf.mxu0
        %655 = vmatprep.mubr.f32.mxu0 0.0
        %656 = vmatmul.mubr.f32.gmra.mxu0 %v540
        %v657 = vpop.f32.mrf.mxu0
        %v658 = vadd.f32 %v530, %v657
        %v659 = vpop.f32.mrf.mxu0
        %660 = vmatprep.mubr.f32.mxu0 0.0
        %661 = vmatmul.mubr.f32.gmra.mxu0 %v543
        %v662 = vpop.f32.mrf.mxu0
        %v663 = vadd.f32 %v530, %v662
        %v664 = vpop.f32.mrf.mxu0
        %665 = vmatprep.mubr.f32.mxu0 0.0
        %666 = vmatmul.mubr.f32.gmra.mxu0 %v546
        %v667 = vpop.f32.mrf.mxu0
        %v668 = vadd.f32 %v530, %v667
        %v669 = vpop.f32.mrf.mxu0
        %670 = vmatprep.mubr.f32.mxu0 0.0
        %671 = vmatmul.mubr.f32.gmra.mxu0 %v549
        %v672 = vpop.f32.mrf.mxu0
        %v673 = vadd.f32 %v530, %v672
        %v674 = vpop.f32.mrf.mxu0
        %675 = vmatprep.mubr.f32.mxu0 0.0
        %676 = vmatmul.mubr.f32.gmra.mxu0 %v552
        %v677 = vpop.f32.mrf.mxu0
        %v678 = vadd.f32 %v530, %v677
        %v679 = vpop.f32.mrf.mxu0
        %680 = vmatprep.mubr.f32.mxu0 0.0
        %681 = vmatmul.mubr.f32.gmra.mxu0 %v555
        %v682 = vpop.f32.mrf.mxu0
        %v683 = vadd.f32 %v530, %v682
        %v684 = vpop.f32.mrf.mxu0
        %685 = vmatprep.mubr.f32.mxu0 0.0
        %686 = vmatmul.mubr.f32.gmra.mxu0 %v558
        %v687 = vpop.f32.mrf.mxu0
        %v688 = vadd.f32 %v530, %v687
        %v689 = vpop.f32.mrf.mxu0
        %690 = vmatprep.mubr.f32.mxu0 0.0
        %691 = vmatmul.mubr.f32.gmra.mxu0 %v561
        %v692 = vpop.f32.mrf.mxu0
        %v693 = vadd.f32 %v530, %v692
        %v694 = vpop.f32.mrf.mxu0
        %695 = vmatprep.mubr.f32.mxu0 0.0
        %696 = vmatmul.mubr.f32.gmra.mxu0 %v564
        %v697 = vpop.f32.mrf.mxu0
        %v698 = vadd.f32 %v530, %v697
        %v699 = vpop.f32.mrf.mxu0
        %700 = vmatprep.mubr.f32.mxu0 0.0
        %701 = vmatmul.mubr.f32.gmra.mxu0 %v567
        %v702 = vpop.f32.mrf.mxu0
        %v703 = vadd.f32 %v530, %v702
        %v704 = vpop.f32.mrf.mxu0
        %705 = vmatprep.mubr.f32.mxu0 0.0
        %706 = vmatmul.mubr.f32.gmra.mxu0 %v570
        %v707 = vpop.f32.mrf.mxu0
        %v708 = vadd.f32 %v530, %v707
        %v709 = vpop.f32.mrf.mxu0
        %710 = vmatprep.mubr.f32.mxu0 0.0
        %711 = vmatmul.mubr.f32.gmra.mxu0 %v573
        %v712 = vpop.f32.mrf.mxu0
        %v713 = vadd.f32 %v530, %v712
        %v714 = vpop.f32.mrf.mxu0
        %715 = vmatprep.mubr.f32.mxu0 0.0
        %716 = vmatmul.mubr.f32.gmra.mxu0 %v576
        %v717 = vpop.f32.mrf.mxu0
        %v718 = vadd.f32 %v530, %v717
        %v719 = vpop.f32.mrf.mxu0
        %720 = vmatprep.mubr.f32.mxu0 0.0
        %721 = vmatmul.mubr.f32.gmra.mxu0 %v579
        %v722 = vpop.f32.mrf.mxu0
        %v723 = vadd.f32 %v530, %v722
        %v724 = vpop.f32.mrf.mxu0
        %725 = vdwg.mxu0
        %v726 = vmax.f32 %v648, 0.0
        %v727 = vmax.f32 %v653, 0.0
        %v728 = vmax.f32 %v658, 0.0
        %v729 = vmax.f32 %v663, 0.0
        %v730 = vmax.f32 %v668, 0.0
        %v731 = vmax.f32 %v673, 0.0
        %v732 = vmax.f32 %v678, 0.0
        %v733 = vmax.f32 %v683, 0.0
        %v734 = vmax.f32 %v688, 0.0
        %v735 = vmax.f32 %v693, 0.0
        %v736 = vmax.f32 %v698, 0.0
        %v737 = vmax.f32 %v703, 0.0
        %v738 = vmax.f32 %v708, 0.0
        %v739 = vmax.f32 %v713, 0.0
        %v740 = vmax.f32 %v718, 0.0
        %v741 = vmax.f32 %v723, 0.0
        %742 = vxpose.xlu0.b32.start [1/16] %v726, 128
        %743 = vxpose.xlu0.b32.cont [2/16] %v727, 128
        %744 = vxpose.xlu0.b32.cont [3/16] %v728, 128
        %745 = vxpose.xlu0.b32.cont [4/16] %v729, 128
        %746 = vxpose.xlu0.b32.cont [5/16] %v730, 128
        %747 = vxpose.xlu0.b32.cont [6/16] %v731, 128
        %748 = vxpose.xlu0.b32.cont [7/16] %v732, 128
        %749 = vxpose.xlu0.b32.cont [8/16] %v733, 128
        %750 = vxpose.xlu0.b32.cont [9/16] %v734, 128
        %751 = vxpose.xlu0.b32.cont [10/16] %v735, 128
        %752 = vxpose.xlu0.b32.cont [11/16] %v736, 128
        %753 = vxpose.xlu0.b32.cont [12/16] %v737, 128
        %754 = vxpose.xlu0.b32.cont [13/16] %v738, 128
        %755 = vxpose.xlu0.b32.cont [14/16] %v739, 128
        %756 = vxpose.xlu0.b32.cont [15/16] %v740, 128
        %757 = vxpose.xlu0.b32.end [16/16] %v741, 128
        %v758 = vpop.trf.xlu0
        %v759 = vpop.trf.xlu0
        %v760 = vpop.trf.xlu0
        %v761 = vpop.trf.xlu0
        %v762 = vpop.trf.xlu0
        %v763 = vpop.trf.xlu0
        %v764 = vpop.trf.xlu0
        %v765 = vpop.trf.xlu0
        %v766 = vpop.trf.xlu0
        %v767 = vpop.trf.xlu0
        %v768 = vpop.trf.xlu0
        %v769 = vpop.trf.xlu0
        %v770 = vpop.trf.xlu0
        %v771 = vpop.trf.xlu0
        %v772 = vpop.trf.xlu0
        %v773 = vpop.trf.xlu0
        %v774 = vld [vmem:[%s5] sm:$0xff]
        %v775 = vld [vmem:[%s5 + $0x8] sm:$0xff]
        %v776 = vld [vmem:[%s5 + $0x10] sm:$0xff]
        %v777 = vld [vmem:[%s5 + $0x18] sm:$0xff]
        %779 = vset.pattern.permute.xlu0 0
        %780 = vperm.xlu0 %779, %v774
        %v781 = vpop.permute.xlu0 %780
        %784 = vset.pattern.permute.xlu0 0
        %785 = vperm.xlu0 %784, %v775
        %v786 = vpop.permute.xlu0 %785
        %789 = vset.pattern.permute.xlu0 0
        %790 = vperm.xlu0 %789, %v776
        %v791 = vpop.permute.xlu0 %790
        %794 = vset.pattern.permute.xlu0 0
        %795 = vperm.xlu0 %794, %v777
        %v796 = vpop.permute.xlu0 %795
        %v798 = vmul.f32 %v758, %v781
        %v799 = vmul.f32 %v759, %v786
        %v800 = vmul.f32 %v760, %v791
        %v801 = vmul.f32 %v761, %v796
        %v802 = vadd.f32 %v798, %v799
        %v803 = vadd.f32 %v802, %v800
        %v804 = vadd.f32 %v803, %v801
        %v805 = vrot.slane %v804, 4
        %v806 = vadd.f32 %v804, %v805
        %v807 = vrot.slane %v806, 2
        %v808 = vadd.f32 %v806, %v807
        %v809 = vrot.slane %v808, 1
        %v810 = vadd.f32 %v808, %v809
        %v811 = vld [vmem:[#allocation2] sm:$0x1]
        %813 = vset.pattern.permute.xlu0 0
        %814 = vperm.xlu0 %813, %v811
        %v815 = vpop.permute.xlu0 %814
        %v817 = vlaneseq
        %v818 = vshrl.u32 %v817, 7
        %v819 = vsub.s32 0, %v818
        %v820 = vrot.slane %v815, %v819
        %v821 = vadd.f32 %v810, %v820
        %v822 = vxor.u32 %v821, 2147483648
        %v823 = vmul.f32 %v822, 1.442695
        %v824 = vpow.pop %v823
        %v825 = vadd.f32 %v824, 1.0
        %v826 = vrcp.pop %v825
        %v827 = vmul.f32 1.0, %v826
        %828 = vst [vmem:[%s273] sm:$0x1] %v827
        %s829 = sand.u32 %s183, 1
        %s830 = scalar_lea.sflag [#allocation4], %s829
        %s831 = sand.u32 %s183, 1
        %s832 = scalar_lea.vmem [#allocation3], %s831
        // Predicated region
        $region49: #{tpu_custom_call.1} parent=47 // pred_check
          %p833 = pneg %p193
        $region50: #{tpu_custom_call.1} parent=47 // pred_check_branch
          %835 = sbr.rel (%p833) target = $region52
        $region51: #{tpu_custom_call.1} parent=47 // pred_region
          %s837 = ssub.s32 16, 16
          %838 = vsyncadd %s830, %s837
          %s839 = smul.addr %s23, 16
          %s840 = scalar_lea.hbm %s7, %s839
          %s842 = sshll.u32 %s832, 4
          %s843 = int_to_ptr.vmem [resolvable:$true] %s842
          %845 = dma.vmem_to_hbm [thread:$0]  %s843, 16, %s840, %s830
        $region52: #{tpu_custom_call.1} parent=47 // pred_fallthru
          _
      $region48: #{tpu_custom_call.1} parent=5 // pred_fallthru
        _
      %p846 = scmp.le.s32.totalorder 2, %s18
      // Predicated region
      $region53: #{tpu_custom_call.1} parent=5 // pred_check
        %p847 = pneg %p846
      $region54: #{tpu_custom_call.1} parent=5 // pred_check_branch
        %849 = sbr.rel (%p847) target = $region56
      $region55: #{tpu_custom_call.1} parent=5 // pred_region
        %s850 = ssub.s32 %s18, 2
        // Predicated region
        $region57: #{tpu_custom_call.1} parent=55 // pred_check
          %p851 = pneg %p199
        $region58: #{tpu_custom_call.1} parent=55 // pred_check_branch
          %853 = sbr.rel (%p851) target = $region60
        $region59: #{tpu_custom_call.1} parent=55 // pred_region
          %s854 = sand.u32 %s184, 1
          %s855 = scalar_lea.sflag [#allocation4], %s854
          %s856 = sand.u32 %s184, 1
          %s857 = scalar_lea.vmem [#allocation3], %s856
          %858 = dma.done %s855, 16
        $region60: #{tpu_custom_call.1} parent=55 // pred_fallthru
          _
      $region56: #{tpu_custom_call.1} parent=5 // pred_fallthru
        _
    $region6: #{tpu_custom_call.1} parent=1 // loop_footer
      %s22 = sadd.s32 1, %s18
    $region7: #{tpu_custom_call.1} parent=1 // loop_footer_branch
      %17 = sbr.rel target = $region3
    $region8: #{tpu_custom_call.1} parent=1 // loop_exit
      _
    %859 = vsyncpa [#allocation4], 1
    %s860 = scalar_lea.sflag [#allocation4], 1
    %861 = vsyncpa %s860, 1

</llo_original>
